<compile_context>
chip_gen: v5e
topology: v5e:2x2
jax: 0.10.0
libtpu: 0.0.40
codegen_flags: <defaults>
</compile_context>

<pallas_src>
import functools

import jax
import jax.numpy as jnp
from jax import lax
from jax.experimental import pallas as pl
from jax.experimental.pallas import tpu as pltpu


def _round_up(n, m):
    return ((n + m - 1) // m) * m


def _vmem_limit_bytes():
    """Per-generation VMEM budget: ~75% of physical (96 MiB v5e/v6e, 48 MiB v7x)."""
    phys = 128 * 1024 * 1024
    try:
        info = pltpu.get_tpu_info()
        cap = getattr(info, "vmem_capacity_bytes", None)
        if cap:
            phys = int(cap)
    except Exception:
        pass
    return min(int(phys * 3 // 4), 96 * 1024 * 1024)


# --------------------------------------------------------------------------
# Stage 1: ONI weight construction, emitted as W^T (in_c, out_c_pad).
# --------------------------------------------------------------------------
def _oni_weight_kernel(z_ref, ge_ref, w_ref, *, oni_itr: int):
    # TODO(synk): for very large in_c on v7x (64 MiB VMEM), tile the in_c-sized
    # tensors (gram and the final v^T contraction) with an inner pipeline.
    z = z_ref[...]                                    # (out_c, in_c) f32

    # zc = z @ (I - 11^T / in_c)  ==  subtract the per-row mean (exact).
    zc = z - jnp.mean(z, axis=1, keepdims=True)

    contract_last = (((1,), (1,)), ((), ()))          # A @ B^T without .T

    # v = zc * rsqrt(||zc @ zc^T||_F)
    gram = lax.dot_general(zc, zc, contract_last,
                           preferred_element_type=jnp.float32)
    fro = jnp.sqrt(jnp.sum(gram * gram))
    v = zc * lax.rsqrt(fro)

    # s = v @ v^T  (out_c x out_c)
    s = lax.dot_general(v, v, contract_last,
                        preferred_element_type=jnp.float32)
    n = s.shape[0]
    eye = (lax.broadcasted_iota(jnp.int32, (n, n), 0)
           == lax.broadcasted_iota(jnp.int32, (n, n), 1)).astype(jnp.float32)

    # Newton-Schulz iterations (f32).
    b = (eye * 3.0 - s) * 0.5
    for _ in range(1, oni_itr):
        bb = jnp.dot(b, b, preferred_element_type=jnp.float32)
        bs = jnp.dot(b, s, preferred_element_type=jnp.float32)
        b = 1.5 * b - 0.5 * jnp.dot(bb, bs, preferred_element_type=jnp.float32)

    # ge = gain/pad selector (out_c, out_c_pad): ge[i, i] = g[i]*sqrt(2), else 0.
    # bg = B @ E folds gain, sqrt(2) scaling and the zero pad in one tiny matmul.
    bg = jnp.dot(b, ge_ref[...], preferred_element_type=jnp.float32)

    # W^T = v^T @ bg  via contraction of dim 0 with dim 0 (no transpose op).
    w_t = lax.dot_general(v, bg, (((0,), (0,)), ((), ())),
                          preferred_element_type=jnp.float32)
    w_ref[...] = w_t.astype(w_ref.dtype)              # (in_c, out_c_pad)


# --------------------------------------------------------------------------
# Stage 2: y = x @ W^T + bias, tiled over batch (and out_c_pad when large).
# --------------------------------------------------------------------------
def _matmul_bias_kernel(x_ref, w_ref, bias_ref, o_ref, *, compute_dtype):
    # In-kernel cast (hides under the MXU) instead of a separate XLA pass on x.
    x = x_ref[...].astype(compute_dtype)
    y = jnp.dot(x, w_ref[...], preferred_element_type=jnp.float32)
    o_ref[...] = (y + bias_ref[...]).astype(o_ref.dtype)


def _stage2_call(x2, wt_pad, bias_pad, tb, tn, out_dtype, compute_dtype,
                 vmem_limit, single_buffer_resident):
    B, in_c = x2.shape
    out_c_pad = wt_pad.shape[1]
    grid = (pl.cdiv(B, tb), pl.cdiv(out_c_pad, tn))

    w_kwargs, b_kwargs = {}, {}
    if single_buffer_resident and grid[1] == 1:
        # W / bias index maps are constant across the grid: one VMEM copy each.
        w_kwargs = dict(pipeline_mode=pl.Buffered(1))
        b_kwargs = dict(pipeline_mode=pl.Buffered(1))

    kernel = functools.partial(_matmul_bias_kernel, compute_dtype=compute_dtype)

    cost = pl.CostEstimate(
        flops=2 * B * in_c * out_c_pad,
        transcendentals=0,
        bytes_accessed=int(x2.size * 4
                           + wt_pad.size * wt_pad.dtype.itemsize
                           + B * out_c_pad * jnp.dtype(out_dtype).itemsize
                           + out_c_pad * 4),
    )

    return pl.pallas_call(
        kernel,
        out_shape=jax.ShapeDtypeStruct((B, out_c_pad), out_dtype),
        grid_spec=pltpu.PrefetchScalarGridSpec(
            num_scalar_prefetch=0,
            grid=grid,
            in_specs=[
                pl.BlockSpec((tb, in_c), lambda i, j: (i, 0)),            # x (f32)
                pl.BlockSpec((in_c, tn), lambda i, j: (0, j), **w_kwargs),  # W^T
                pl.BlockSpec((1, tn), lambda i, j: (0, j), **b_kwargs),     # bias
            ],
            out_specs=pl.BlockSpec((tb, tn), lambda i, j: (i, j)),
        ),
        compiler_params=pltpu.CompilerParams(
            dimension_semantics=("parallel", "parallel"),
            vmem_limit_bytes=int(vmem_limit),
        ),
        cost_estimate=cost,
    )(x2, wt_pad, bias_pad)


def linear_oni_forward(x, z, g, bias, *, oni_itr=5, scaling=True,
                       block_b=1024, compute_dtype=jnp.bfloat16,
                       out_dtype=jnp.float32):
    """Pallas implementation of Linear_ONI.forward."""
    B = x.shape[0]
    x2 = x.reshape(B, -1).astype(jnp.float32)
    out_c, in_c = z.shape
    assert x2.shape[1] == in_c
    out_c_pad = _round_up(out_c, 128)
    cdt = jnp.dtype(compute_dtype)
    odt = jnp.dtype(out_dtype)

    # ---- Stage 1: W^T (in_c, out_c_pad); gain / sqrt(2) / pad folded into E. ----
    if oni_itr >= 1:
        g_eff = g.reshape(out_c).astype(jnp.float32)
        if scaling:
            g_eff = g_eff * jnp.sqrt(jnp.float32(2.0))
        ge = jnp.zeros((out_c, out_c_pad), jnp.float32)
        ge = ge.at[jnp.arange(out_c), jnp.arange(out_c)].set(g_eff)
        oni_kernel = functools.partial(_oni_weight_kernel, oni_itr=oni_itr)
        wt_pad = pl.pallas_call(
            oni_kernel,
            out_shape=jax.ShapeDtypeStruct((in_c, out_c_pad), cdt),
            in_specs=[pl.BlockSpec(memory_space=pltpu.MemorySpace.VMEM)] * 2,
            out_specs=pl.BlockSpec(memory_space=pltpu.MemorySpace.VMEM),
        )(z.astype(jnp.float32), ge)
    else:
        # oni_itr < 1 path: plain z weight (transposed + padded), no gain/scaling.
        wt_pad = jnp.zeros((in_c, out_c_pad), cdt)
        wt_pad = wt_pad.at[:, :out_c].set(z.T.astype(cdt))

    bias_pad = jnp.zeros((1, out_c_pad), jnp.float32)
    bias_pad = bias_pad.at[:, :out_c].set(bias.reshape(1, out_c).astype(jnp.float32))

    # ---- Stage 2 tile selection from the per-generation VMEM budget. ----
    vmem_limit = _vmem_limit_bytes()
    budget = int(vmem_limit * 0.9)

    w_full = in_c * out_c_pad * cdt.itemsize
    if w_full <= budget // 2:
        tn = out_c_pad
        w_resident = w_full                     # single-buffered resident W
    else:
        tn = max(128, min(out_c_pad,
                          ((budget // 4) // (in_c * cdt.itemsize)) // 128 * 128))
        w_resident = 2 * in_c * tn * cdt.itemsize   # double-buffered per N tile
        # TODO(synk): add an "arbitrary" K axis over in_c with an f32 VMEM
        # accumulator for layers where even one (in_c, 128) W slab exceeds VMEM.

    per_row = 2 * in_c * 4 + 2 * tn * odt.itemsize   # x (f32) + out double buffers
    avail = max(budget - w_resident - 2 * tn * 4, per_row * 8)
    tb = min(B, block_b, max(8, int(avail // per_row)))
    if tb < B:
        tb = max(8, (tb // 8) * 8)
    if B >= 16 and tb >= B:
        # Keep >= 2 grid steps on the parallel batch axis (v7x: 2 TensorCores).
        tb = max(8, ((B // 2) // 8) * 8)

    # ---- Stage 2: y = x @ W^T + bias. ----
    single_buf = (pl.cdiv(out_c_pad, tn) == 1)
    try:
        y_pad = _stage2_call(x2, wt_pad, bias_pad, tb, tn, odt, cdt,
                             vmem_limit, single_buffer_resident=single_buf)
    except Exception:
        # Fallback if this runtime rejects pl.Buffered(1) single-buffering.
        y_pad = _stage2_call(x2, wt_pad, bias_pad, tb, tn, odt, cdt,
                             vmem_limit, single_buffer_resident=False)

    if out_c_pad == out_c:
        return y_pad
    return y_pad[:, :out_c]


def _reference_forward(x, z, g, bias, *, oni_itr=5, scaling=True):
    """Pure-JAX f32 reference mirroring the PyTorch module (for verification)."""
    B = x.shape[0]
    x2 = x.reshape(B, -1).astype(jnp.float32)
    in_c = z.shape[1]
    if oni_itr >= 1:
        jmat = (jnp.eye(in_c, dtype=jnp.float32)
                - jnp.ones((in_c, in_c), jnp.float32) / in_c)
        zc = z @ jmat
        v = zc * (1.0 / jnp.sqrt(jnp.linalg.norm(zc @ zc.T)))
        s = v @ v.T
        b = (jnp.eye(s.shape[0], dtype=s.dtype) * 3.0 - s) * 0.5
        for _ in range(1, oni_itr):
            b = 1.5 * b - 0.5 * (b @ b) @ (b @ s)
        w = b.T @ v
        w = w * g
        if scaling:
            w = w * jnp.sqrt(2.0)
    else:
        w = z
    return x2 @ w.T + bias[None, :]


if __name__ == "__main__":
    key = jax.random.PRNGKey(0)
    in_c, out_c = 64, 32

    kx, kz, kg, kb = jax.random.split(key, 4)

    # Input: NCHW-like (2, 4, 4, 4) -> flattened to (2, 64) inside the wrapper.
    x = jax.random.normal(kx, (2, 4, 4, 4), dtype=jnp.float32)

    # z parameter with (deterministic) orthogonal rows, like nn.init.orthogonal_.
    a = jax.random.normal(kz, (out_c, in_c), dtype=jnp.float32)
    q, r = jnp.linalg.qr(a.T)                      # q: (in_c, out_c)
    q = q * jnp.sign(jnp.diag(r))[None, :]
    z = q.T                                        # (out_c, in_c), orthonormal rows

    # Non-trivial gain / bias to exercise those paths.
    g = 1.0 + 0.1 * jax.random.normal(kg, (out_c, 1), dtype=jnp.float32)
    bias = 0.1 * jax.random.normal(kb, (out_c,), dtype=jnp.float32)

    out = linear_oni_forward(x, z, g, bias, oni_itr=5, scaling=True)
    out = jax.block_until_ready(out)

    ref = _reference_forward(x, z, g, bias, oni_itr=5, scaling=True)
    assert out.shape == (2, out_c)
    # bf16 x @ W^T on the MXU: tolerance loosened vs the pure-f32 reference.
    max_err = jnp.max(jnp.abs(out - ref))
    assert jnp.allclose(out, ref, atol=3e-2, rtol=3e-2), (
        f"mismatch vs reference: max abs err {max_err}")

    print("KERNEL_OK")
</pallas_src>

<mosaic_0001>
module attributes {stable_mosaic.version = 11 : i64} {
  func.func @_oni_weight_kernel(%arg0: memref<32x64xf32, #tpu.memory_space<vmem>>, %arg1: memref<32x128xf32, #tpu.memory_space<vmem>>, %arg2: memref<64x128xbf16, #tpu.memory_space<vmem>>) attributes {dimension_semantics = [], scalar_prefetch = 0 : i64, scratch_operands = 0 : i64, tpu.core_type = #tpu.core_type<tc>} {
    %c0 = arith.constant 0 : index
    %c0_0 = arith.constant 0 : index
    %0 = vector.load %arg0[%c0, %c0_0] : memref<32x64xf32, #tpu.memory_space<vmem>>, vector<32x64xf32>
    %cst = arith.constant dense<0.000000e+00> : vector<32xf32>
    %1 = vector.multi_reduction <add>, %0, %cst [1] : vector<32x64xf32> to vector<32xf32>
    %2 = vector.shape_cast %1 : vector<32xf32> to vector<32x1xf32>
    %cst_1 = arith.constant 6.400000e+01 : f32
    %3 = vector.broadcast %cst_1 : f32 to vector<32x1xf32>
    %4 = arith.divf %2, %3 : vector<32x1xf32>
    %5 = vector.broadcast %4 : vector<32x1xf32> to vector<32x64xf32>
    %6 = arith.subf %0, %5 : vector<32x64xf32>
    %cst_2 = arith.constant dense<0.000000e+00> : vector<32x32xf32>
    %7 = tpu.matmul %6, %6, %cst_2 {dimension_numbers = #tpu.dot_dimension_numbers<[1], [1], [0], [0], [0, 0, 1, 0], [], []>} : vector<32x64xf32>, vector<32x64xf32>, vector<32x32xf32> -> vector<32x32xf32>
    %8 = arith.mulf %7, %7 : vector<32x32xf32>
    %9 = vector.shape_cast %8 : vector<32x32xf32> to vector<1x32x32xf32>
    %cst_3 = arith.constant dense<0.000000e+00> : vector<1xf32>
    %10 = vector.multi_reduction <add>, %9, %cst_3 [1, 2] : vector<1x32x32xf32> to vector<1xf32>
    %11 = vector.shape_cast %10 : vector<1xf32> to vector<1x1x1xf32>
    %12 = vector.extract %11[0, 0, 0] : f32 from vector<1x1x1xf32>
    %13 = math.sqrt %12 : f32
    %14 = math.rsqrt %13 : f32
    %15 = vector.broadcast %14 : f32 to vector<32x64xf32>
    %16 = arith.mulf %6, %15 : vector<32x64xf32>
    %cst_4 = arith.constant dense<0.000000e+00> : vector<32x32xf32>
    %17 = tpu.matmul %16, %16, %cst_4 {dimension_numbers = #tpu.dot_dimension_numbers<[1], [1], [0], [0], [0, 0, 1, 0], [], []>} : vector<32x64xf32>, vector<32x64xf32>, vector<32x32xf32> -> vector<32x32xf32>
    %18 = tpu.iota {dimensions = array<i32: 0>} : vector<32x32xi32>
    %19 = tpu.iota {dimensions = array<i32: 1>} : vector<32x32xi32>
    %20 = arith.cmpi eq, %18, %19 : vector<32x32xi32>
    %21 = arith.extui %20 : vector<32x32xi1> to vector<32x32xi32>
    %22 = arith.sitofp %21 : vector<32x32xi32> to vector<32x32xf32>
    %cst_5 = arith.constant 3.000000e+00 : f32
    %23 = vector.broadcast %cst_5 : f32 to vector<32x32xf32>
    %24 = arith.mulf %22, %23 : vector<32x32xf32>
    %25 = arith.subf %24, %17 : vector<32x32xf32>
    %cst_6 = arith.constant 5.000000e-01 : f32
    %26 = vector.broadcast %cst_6 : f32 to vector<32x32xf32>
    %27 = arith.mulf %25, %26 : vector<32x32xf32>
    %cst_7 = arith.constant dense<0.000000e+00> : vector<32x32xf32>
    %28 = tpu.matmul %27, %27, %cst_7 {dimension_numbers = #tpu.dot_dimension_numbers<[1], [0], [0], [1], [0, 0, 1, 1], [], []>} : vector<32x32xf32>, vector<32x32xf32>, vector<32x32xf32> -> vector<32x32xf32>
    %cst_8 = arith.constant dense<0.000000e+00> : vector<32x32xf32>
    %29 = tpu.matmul %27, %17, %cst_8 {dimension_numbers = #tpu.dot_dimension_numbers<[1], [0], [0], [1], [0, 0, 1, 1], [], []>} : vector<32x32xf32>, vector<32x32xf32>, vector<32x32xf32> -> vector<32x32xf32>
    %cst_9 = arith.constant 1.500000e+00 : f32
    %30 = vector.broadcast %cst_9 : f32 to vector<32x32xf32>
    %31 = arith.mulf %30, %27 : vector<32x32xf32>
    %cst_10 = arith.constant dense<0.000000e+00> : vector<32x32xf32>
    %32 = tpu.matmul %28, %29, %cst_10 {dimension_numbers = #tpu.dot_dimension_numbers<[1], [0], [0], [1], [0, 0, 1, 1], [], []>} : vector<32x32xf32>, vector<32x32xf32>, vector<32x32xf32> -> vector<32x32xf32>
    %cst_11 = arith.constant 5.000000e-01 : f32
    %33 = vector.broadcast %cst_11 : f32 to vector<32x32xf32>
    %34 = arith.mulf %33, %32 : vector<32x32xf32>
    %35 = arith.subf %31, %34 : vector<32x32xf32>
    %cst_12 = arith.constant dense<0.000000e+00> : vector<32x32xf32>
    %36 = tpu.matmul %35, %35, %cst_12 {dimension_numbers = #tpu.dot_dimension_numbers<[1], [0], [0], [1], [0, 0, 1, 1], [], []>} : vector<32x32xf32>, vector<32x32xf32>, vector<32x32xf32> -> vector<32x32xf32>
    %cst_13 = arith.constant dense<0.000000e+00> : vector<32x32xf32>
    %37 = tpu.matmul %35, %17, %cst_13 {dimension_numbers = #tpu.dot_dimension_numbers<[1], [0], [0], [1], [0, 0, 1, 1], [], []>} : vector<32x32xf32>, vector<32x32xf32>, vector<32x32xf32> -> vector<32x32xf32>
    %cst_14 = arith.constant 1.500000e+00 : f32
    %38 = vector.broadcast %cst_14 : f32 to vector<32x32xf32>
    %39 = arith.mulf %38, %35 : vector<32x32xf32>
    %cst_15 = arith.constant dense<0.000000e+00> : vector<32x32xf32>
    %40 = tpu.matmul %36, %37, %cst_15 {dimension_numbers = #tpu.dot_dimension_numbers<[1], [0], [0], [1], [0, 0, 1, 1], [], []>} : vector<32x32xf32>, vector<32x32xf32>, vector<32x32xf32> -> vector<32x32xf32>
    %cst_16 = arith.constant 5.000000e-01 : f32
    %41 = vector.broadcast %cst_16 : f32 to vector<32x32xf32>
    %42 = arith.mulf %41, %40 : vector<32x32xf32>
    %43 = arith.subf %39, %42 : vector<32x32xf32>
    %cst_17 = arith.constant dense<0.000000e+00> : vector<32x32xf32>
    %44 = tpu.matmul %43, %43, %cst_17 {dimension_numbers = #tpu.dot_dimension_numbers<[1], [0], [0], [1], [0, 0, 1, 1], [], []>} : vector<32x32xf32>, vector<32x32xf32>, vector<32x32xf32> -> vector<32x32xf32>
    %cst_18 = arith.constant dense<0.000000e+00> : vector<32x32xf32>
    %45 = tpu.matmul %43, %17, %cst_18 {dimension_numbers = #tpu.dot_dimension_numbers<[1], [0], [0], [1], [0, 0, 1, 1], [], []>} : vector<32x32xf32>, vector<32x32xf32>, vector<32x32xf32> -> vector<32x32xf32>
    %cst_19 = arith.constant 1.500000e+00 : f32
    %46 = vector.broadcast %cst_19 : f32 to vector<32x32xf32>
    %47 = arith.mulf %46, %43 : vector<32x32xf32>
    %cst_20 = arith.constant dense<0.000000e+00> : vector<32x32xf32>
    %48 = tpu.matmul %44, %45, %cst_20 {dimension_numbers = #tpu.dot_dimension_numbers<[1], [0], [0], [1], [0, 0, 1, 1], [], []>} : vector<32x32xf32>, vector<32x32xf32>, vector<32x32xf32> -> vector<32x32xf32>
    %cst_21 = arith.constant 5.000000e-01 : f32
    %49 = vector.broadcast %cst_21 : f32 to vector<32x32xf32>
    %50 = arith.mulf %49, %48 : vector<32x32xf32>
    %51 = arith.subf %47, %50 : vector<32x32xf32>
    %cst_22 = arith.constant dense<0.000000e+00> : vector<32x32xf32>
    %52 = tpu.matmul %51, %51, %cst_22 {dimension_numbers = #tpu.dot_dimension_numbers<[1], [0], [0], [1], [0, 0, 1, 1], [], []>} : vector<32x32xf32>, vector<32x32xf32>, vector<32x32xf32> -> vector<32x32xf32>
    %cst_23 = arith.constant dense<0.000000e+00> : vector<32x32xf32>
    %53 = tpu.matmul %51, %17, %cst_23 {dimension_numbers = #tpu.dot_dimension_numbers<[1], [0], [0], [1], [0, 0, 1, 1], [], []>} : vector<32x32xf32>, vector<32x32xf32>, vector<32x32xf32> -> vector<32x32xf32>
    %cst_24 = arith.constant 1.500000e+00 : f32
    %54 = vector.broadcast %cst_24 : f32 to vector<32x32xf32>
    %55 = arith.mulf %54, %51 : vector<32x32xf32>
    %cst_25 = arith.constant dense<0.000000e+00> : vector<32x32xf32>
    %56 = tpu.matmul %52, %53, %cst_25 {dimension_numbers = #tpu.dot_dimension_numbers<[1], [0], [0], [1], [0, 0, 1, 1], [], []>} : vector<32x32xf32>, vector<32x32xf32>, vector<32x32xf32> -> vector<32x32xf32>
    %cst_26 = arith.constant 5.000000e-01 : f32
    %57 = vector.broadcast %cst_26 : f32 to vector<32x32xf32>
    %58 = arith.mulf %57, %56 : vector<32x32xf32>
    %59 = arith.subf %55, %58 : vector<32x32xf32>
    %c0_27 = arith.constant 0 : index
    %c0_28 = arith.constant 0 : index
    %60 = vector.load %arg1[%c0_27, %c0_28] : memref<32x128xf32, #tpu.memory_space<vmem>>, vector<32x128xf32>
    %cst_29 = arith.constant dense<0.000000e+00> : vector<32x128xf32>
    %61 = tpu.matmul %59, %60, %cst_29 {dimension_numbers = #tpu.dot_dimension_numbers<[1], [0], [0], [1], [0, 0, 1, 1], [], []>} : vector<32x32xf32>, vector<32x128xf32>, vector<32x128xf32> -> vector<32x128xf32>
    %cst_30 = arith.constant dense<0.000000e+00> : vector<64x128xf32>
    %62 = tpu.matmul %16, %61, %cst_30 {dimension_numbers = #tpu.dot_dimension_numbers<[0], [0], [1], [1], [0, 1, 1, 1], [], []>} : vector<32x64xf32>, vector<32x128xf32>, vector<64x128xf32> -> vector<64x128xf32>
    %63 = arith.truncf %62 : vector<64x128xf32> to vector<64x128xbf16>
    %c0_31 = arith.constant 0 : index
    %c0_32 = arith.constant 0 : index
    %64 = vector.load %arg2[%c0_31, %c0_32] : memref<64x128xbf16, #tpu.memory_space<vmem>>, vector<64x128xbf16>
    tpu.vector_store %arg2[%c0_31, %c0_32], %63 {strides = array<i32>} : memref<64x128xbf16, #tpu.memory_space<vmem>>, vector<64x128xbf16>,
    return
  }
}

</mosaic_0001>

<llo_original>
// kernel: tpu_custom_call.1
$region0: #{tpu_custom_call.1}
  #allocation0 [shape = 'u32[]', space=smem, size = 0x4, offset = 0x4, fixed_abs, tag = 'smem constant byte address 0x4 - core index']
  #allocation1 [shape = 'u32[72,128]{1,0:T(1,128)}', space=vmem, size = 0x9000, scoped, tag = 'internal scratch']
  %s0 = inlined_call_operand.hbm [shape: f32[32,64], index: 0, kind: input, shape index: {}]
  %s1 = inlined_call_operand.hbm [shape: f32[32,128], index: 1, kind: input, shape index: {}]
  %s2 = inlined_call_operand.hbm [shape: bf16[64,128], index: 2, kind: output, shape index: {}]
  %s3 = sld [smem:[#allocation0]]
  $region26: #{tpu_custom_call.1} parent=0
    _
  %s5 = ssub.s32 1, %s3
  %s6 = scalar_select 0, %s5, %s3
  $region1: #{tpu_custom_call.1} parent=0
    #allocation2 [shape = 'u8[16384]{0}', space=vmem, size = 0x4000, scoped, tag = 'input window, operand 0, single buffered']
    #allocation3 [shape = 's32[1]{0}', space=sflag, size = 0x4, scoped, tag = 'scoped memory for tpu_custom_call.1']
    #allocation4 [shape = 's32[1]{0}', space=sflag, size = 0x4, scoped, tag = 'scoped memory for tpu_custom_call.1']
    #allocation5 [shape = 'u8[16384]{0}', space=vmem, size = 0x4000, scoped, tag = 'input window, operand 1, single buffered']
    #allocation6 [shape = 's32[1]{0}', space=sflag, size = 0x4, scoped, tag = 'scoped memory for tpu_custom_call.1']
    #allocation7 [shape = 'u8[16384]{0}', space=vmem, size = 0x4000, scoped, tag = 'output window, operand 0, single buffered']
    %7 = vsyncpa [#allocation3], 0
    %8 = vsyncpa [#allocation6], 0
    %9 = vsyncpa [#allocation4], 0
    // Predicated region
    $region2: #{tpu_custom_call.1} parent=1 // pred_check
      _
    $region3: #{tpu_custom_call.1} parent=1 // pred_check_branch
      %11 = sbr.rel (0) target = $region5
    $region4: #{tpu_custom_call.1} parent=1 // pred_region
      %13 = vsyncadd [#allocation3], 0
      %s14 = sshll.u32 %s0, 4
      %s15 = int_to_ptr.hbm [resolvable:$true] %s14
      %s16 = sshll.u32 [#allocation2], 4
      %s17 = int_to_ptr.vmem [resolvable:$true] %s16
      %22 = dma.hbm_to_vmem [thread:$0]  %s15, 512, %s17, [#allocation3], 128, 128, 8
    $region5: #{tpu_custom_call.1} parent=1 // pred_fallthru
      _
    // Predicated region
    $region6: #{tpu_custom_call.1} parent=1 // pred_check
      _
    $region7: #{tpu_custom_call.1} parent=1 // pred_check_branch
      %24 = sbr.rel (0) target = $region9
    $region8: #{tpu_custom_call.1} parent=1 // pred_region
      %26 = vsyncadd [#allocation6], 0
      %s27 = sshll.u32 %s1, 4
      %s28 = int_to_ptr.hbm [resolvable:$true] %s27
      %s29 = sshll.u32 [#allocation5], 4
      %s30 = int_to_ptr.vmem [resolvable:$true] %s29
      %35 = dma.hbm_to_vmem [thread:$0]  %s28, 512, %s30, [#allocation6], 128, 128, 8
    $region9: #{tpu_custom_call.1} parent=1 // pred_fallthru
      _
    // Predicated region
    $region10: #{tpu_custom_call.1} parent=1 // pred_check
      _
    $region11: #{tpu_custom_call.1} parent=1 // pred_check_branch
      %37 = sbr.rel (0) target = $region13
    $region12: #{tpu_custom_call.1} parent=1 // pred_region
      %39 = dma.done [#allocation3], 512
    $region13: #{tpu_custom_call.1} parent=1 // pred_fallthru
      _
    // Predicated region
    $region14: #{tpu_custom_call.1} parent=1 // pred_check
      _
    $region15: #{tpu_custom_call.1} parent=1 // pred_check_branch
      %41 = sbr.rel (0) target = $region17
    $region16: #{tpu_custom_call.1} parent=1 // pred_region
      %43 = dma.done [#allocation6], 512
    $region17: #{tpu_custom_call.1} parent=1 // pred_fallthru
      _
    %v44 = vld [vmem:[#allocation2] sm:$0xff]
    %v45 = vld [vmem:[#allocation2 + $0x8] sm:$0xff]
    %v46 = vld [vmem:[#allocation2 + $0x10] sm:$0xff]
    %v47 = vld [vmem:[#allocation2 + $0x18] sm:$0xff]
    %vm48 = vcmask 523264
    %v49 = vsel %vm48, %v44, 0.0
    %50 = vadd.xlane.f32.xlu0 %v49
    %v51 = vpop.xlane.xlu0 %50
    %v52 = vsel %vm48, %v45, 0.0
    %53 = vadd.xlane.f32.xlu0 %v52
    %v54 = vpop.xlane.xlu0 %53
    %v55 = vsel %vm48, %v46, 0.0
    %56 = vadd.xlane.f32.xlu0 %v55
    %v57 = vpop.xlane.xlu0 %56
    %v58 = vsel %vm48, %v47, 0.0
    %59 = vadd.xlane.f32.xlu0 %v58
    %v60 = vpop.xlane.xlu0 %59
    %v61 = vrcp.pop 64.0
    %v62 = vmul.f32 64.0, %v61
    %v63 = vsub.f32 1.0, %v62
    %v64 = vmul.f32 %v61, %v63
    %v65 = vadd.f32 %v61, %v64
    %vm66 = vweird.f32 %v61
    %v67 = vsel %vm66, %v61, %v65
    %v68 = vmul.f32 %v51, %v67
    %v69 = vmul.f32 %v54, %v67
    %v70 = vmul.f32 %v57, %v67
    %v71 = vmul.f32 %v60, %v67
    %v72 = vsub.f32 %v44, %v68
    %v73 = vsub.f32 %v45, %v69
    %v74 = vsub.f32 %v46, %v70
    %v75 = vsub.f32 %v47, %v71
    %v77 = vsel %vm48, %v72, 0
    %v80 = vsel %vm48, %v73, 0
    %v83 = vsel %vm48, %v74, 0
    %v86 = vsel %vm48, %v75, 0
    %88 = vmatpush.xpose.msra.mxu0 0.0
    %89 = vmatpush.xpose.msra.mxu0 0.0
    %90 = vmatpush.xpose.msra.mxu0 0.0
    %91 = vmatpush.xpose.msra.mxu0 0.0
    %92 = vmatpush.xpose.msra.mxu0 0.0
    %93 = vmatpush.xpose.msra.mxu0 0.0
    %94 = vmatpush.xpose.msra.mxu0 0.0
    %95 = vmatpush.xpose.msra.mxu0 0.0
    %96 = vmatpush.xpose.msra.mxu0 0.0
    %97 = vmatpush.xpose.msra.mxu0 0.0
    %98 = vmatpush.xpose.msra.mxu0 0.0
    %99 = vmatpush.xpose.msra.mxu0 0.0
    %100 = vmatpush.xpose.msra.mxu0 %v86
    %101 = vmatpush.xpose.msra.mxu0 %v83
    %102 = vmatpush.xpose.msra.mxu0 %v80
    %103 = vmatpush.xpose.msra.mxu0 %v77
    %104 = vmatmul.f32.gmra.mxu0 %v77
    %v105 = vpop.f32.mrf.mxu0
    %v106 = vadd.f32 0.0, %v105
    %107 = vmatmul.f32.gmra.mxu0 %v80
    %v108 = vpop.f32.mrf.mxu0
    %v109 = vadd.f32 0.0, %v108
    %110 = vmatmul.f32.gmra.mxu0 %v83
    %v111 = vpop.f32.mrf.mxu0
    %v112 = vadd.f32 0.0, %v111
    %113 = vmatmul.f32.gmra.mxu0 %v86
    %v114 = vpop.f32.mrf.mxu0
    %v115 = vadd.f32 0.0, %v114
    %116 = vdwg.mxu0
    %v117 = vmul.f32 %v106, %v106
    %v118 = vmul.f32 %v109, %v109
    %v119 = vmul.f32 %v112, %v112
    %v120 = vmul.f32 %v115, %v115
    %vm121 = vcmask 261120
    %v122 = vsel %vm121, %v117, 0.0
    %v123 = vsel %vm121, %v118, 0.0
    %v124 = vadd.f32 %v122, %v123
    %v125 = vsel %vm121, %v119, 0.0
    %v126 = vadd.f32 %v124, %v125
    %v127 = vsel %vm121, %v120, 0.0
    %v128 = vadd.f32 %v126, %v127
    %129 = vadd.xlane.f32.xlu0 %v128
    %v130 = vpop.xlane.xlu0 %129
    %v131 = vrot.slane %v130, 4
    %v132 = vadd.f32 %v130, %v131
    %v133 = vrot.slane %v132, 2
    %v134 = vadd.f32 %v132, %v133
    %v135 = vrot.slane %v134, 1
    %v136 = vadd.f32 %v134, %v135
    %s137 = vtos %v136
    %v138 = vstv %s137
    %v139 = vrsqrt.pop %v138
    %v140 = vmul.f32 %v139, %v138
    %v141 = vmul.f32 %v140, %v139
    %v142 = vmul.f32 0.5, %v141
    %v143 = vsub.f32 1.5, %v142
    %v144 = vmul.f32 %v139, %v143
    %v145 = vmul.f32 %v138, %v144
    %vm146 = vcmp.eq.f32.partialorder %v138, inf
    %v147 = vsel %vm146, %v138, %v145
    %vm148 = vcmp.eq.f32.partialorder %v138, 0.0
    %v149 = vand.u32 %v138, 2147483648
    %v150 = vsel %vm148, %v149, %v147
    %s151 = vtos %v150
    %v152 = vstv %s151
    %v153 = vrsqrt.pop %v152
    %v154 = vmul.f32 %v153, %v152
    %v155 = vmul.f32 %v154, %v153
    %v156 = vmul.f32 0.5, %v155
    %v157 = vsub.f32 1.5, %v156
    %v158 = vmul.f32 %v153, %v157
    %vm159 = vweird.f32 %v152
    %vm160 = vweird.f32 %v153
    %vm161 = vmor %vm159, %vm160
    %v162 = vsel %vm161, %v153, %v158
    %s163 = vtos %v162
    %v164 = vstv %s163
    %v165 = vmul.f32 %v72, %v164
    %v166 = vmul.f32 %v73, %v164
    %v167 = vmul.f32 %v74, %v164
    %v168 = vmul.f32 %v75, %v164
    %v170 = vsel %vm48, %v165, 0
    %v173 = vsel %vm48, %v166, 0
    %v176 = vsel %vm48, %v167, 0
    %v179 = vsel %vm48, %v168, 0
    %181 = vmatpush.xpose.msra.mxu0 0.0
    %182 = vmatpush.xpose.msra.mxu0 0.0
    %183 = vmatpush.xpose.msra.mxu0 0.0
    %184 = vmatpush.xpose.msra.mxu0 0.0
    %185 = vmatpush.xpose.msra.mxu0 0.0
    %186 = vmatpush.xpose.msra.mxu0 0.0
    %187 = vmatpush.xpose.msra.mxu0 0.0
    %188 = vmatpush.xpose.msra.mxu0 0.0
    %189 = vmatpush.xpose.msra.mxu0 0.0
    %190 = vmatpush.xpose.msra.mxu0 0.0
    %191 = vmatpush.xpose.msra.mxu0 0.0
    %192 = vmatpush.xpose.msra.mxu0 0.0
    %193 = vmatpush.xpose.msra.mxu0 %v179
    %194 = vmatpush.xpose.msra.mxu0 %v176
    %195 = vmatpush.xpose.msra.mxu0 %v173
    %196 = vmatpush.xpose.msra.mxu0 %v170
    %197 = vmatmul.f32.gmra.mxu0 %v170
    %v198 = vpop.f32.mrf.mxu0
    %v199 = vadd.f32 0.0, %v198
    %200 = vmatmul.f32.gmra.mxu0 %v173
    %v201 = vpop.f32.mrf.mxu0
    %v202 = vadd.f32 0.0, %v201
    %203 = vmatmul.f32.gmra.mxu0 %v176
    %v204 = vpop.f32.mrf.mxu0
    %v205 = vadd.f32 0.0, %v204
    %206 = vmatmul.f32.gmra.mxu0 %v179
    %v207 = vpop.f32.mrf.mxu0
    %v208 = vadd.f32 0.0, %v207
    %209 = vdwg.mxu0
    %v210 = vlaneseq
    %v211 = vshrl.u32 %v210, 7
    %v212 = vadd.s32 %v211, 8
    %v213 = vadd.s32 %v211, 16
    %v214 = vadd.s32 %v211, 24
    %v215 = vlaneseq
    %v216 = vand.u32 %v215, 127
    %vm217 = vcmp.eq.s32.totalorder %v211, %v216
    %vm218 = vcmp.eq.s32.totalorder %v212, %v216
    %vm219 = vcmp.eq.s32.totalorder %v213, %v216
    %vm220 = vcmp.eq.s32.totalorder %v214, %v216
    %v221 = vsel %vm217, 1, 0
    %v222 = vsel %vm218, 1, 0
    %v223 = vsel %vm219, 1, 0
    %v224 = vsel %vm220, 1, 0
    %v225 = vcvt.s32.f32 %v221
    %v226 = vcvt.s32.f32 %v222
    %v227 = vcvt.s32.f32 %v223
    %v228 = vcvt.s32.f32 %v224
    %v229 = vmul.f32 %v225, 3.0
    %v230 = vmul.f32 %v226, 3.0
    %v231 = vmul.f32 %v227, 3.0
    %v232 = vmul.f32 %v228, 3.0
    %v233 = vsub.f32 %v229, %v199
    %v234 = vsub.f32 %v230, %v202
    %v235 = vsub.f32 %v231, %v205
    %v236 = vsub.f32 %v232, %v208
    %v237 = vmul.f32 %v233, 0.5
    %v238 = vmul.f32 %v234, 0.5
    %v239 = vmul.f32 %v235, 0.5
    %v240 = vmul.f32 %v236, 0.5
    %v242 = vsel %vm121, %v237, 0
    %v245 = vsel %vm121, %v238, 0
    %v248 = vsel %vm121, %v239, 0
    %v251 = vsel %vm121, %v240, 0
    %253 = vmatpush.msra.mxu0 0.0
    %254 = vmatpush.msra.mxu0 0.0
    %255 = vmatpush.msra.mxu0 0.0
    %256 = vmatpush.msra.mxu0 0.0
    %257 = vmatpush.msra.mxu0 0.0
    %258 = vmatpush.msra.mxu0 0.0
    %259 = vmatpush.msra.mxu0 0.0
    %260 = vmatpush.msra.mxu0 0.0
    %261 = vmatpush.msra.mxu0 0.0
    %262 = vmatpush.msra.mxu0 0.0
    %263 = vmatpush.msra.mxu0 0.0
    %264 = vmatpush.msra.mxu0 0.0
    %265 = vmatpush.msra.mxu0 %v240
    %266 = vmatpush.msra.mxu0 %v239
    %267 = vmatpush.msra.mxu0 %v238
    %268 = vmatpush.msra.mxu0 %v237
    %269 = vmatmul.f32.gmra.mxu0 %v242
    %v270 = vpop.f32.mrf.mxu0
    %v271 = vadd.f32 0.0, %v270
    %272 = vmatmul.f32.gmra.mxu0 %v245
    %v273 = vpop.f32.mrf.mxu0
    %v274 = vadd.f32 0.0, %v273
    %275 = vmatmul.f32.gmra.mxu0 %v248
    %v276 = vpop.f32.mrf.mxu0
    %v277 = vadd.f32 0.0, %v276
    %278 = vmatmul.f32.gmra.mxu0 %v251
    %v279 = vpop.f32.mrf.mxu0
    %v280 = vadd.f32 0.0, %v279
    %281 = vdwg.mxu0
    %282 = vmatpush.msra.mxu0 0.0
    %283 = vmatpush.msra.mxu0 0.0
    %284 = vmatpush.msra.mxu0 0.0
    %285 = vmatpush.msra.mxu0 0.0
    %286 = vmatpush.msra.mxu0 0.0
    %287 = vmatpush.msra.mxu0 0.0
    %288 = vmatpush.msra.mxu0 0.0
    %289 = vmatpush.msra.mxu0 0.0
    %290 = vmatpush.msra.mxu0 0.0
    %291 = vmatpush.msra.mxu0 0.0
    %292 = vmatpush.msra.mxu0 0.0
    %293 = vmatpush.msra.mxu0 0.0
    %294 = vmatpush.msra.mxu0 %v208
    %295 = vmatpush.msra.mxu0 %v205
    %296 = vmatpush.msra.mxu0 %v202
    %297 = vmatpush.msra.mxu0 %v199
    %298 = vmatmul.f32.gmra.mxu0 %v242
    %v299 = vpop.f32.mrf.mxu0
    %v300 = vadd.f32 0.0, %v299
    %301 = vmatmul.f32.gmra.mxu0 %v245
    %v302 = vpop.f32.mrf.mxu0
    %v303 = vadd.f32 0.0, %v302
    %304 = vmatmul.f32.gmra.mxu0 %v248
    %v305 = vpop.f32.mrf.mxu0
    %v306 = vadd.f32 0.0, %v305
    %307 = vmatmul.f32.gmra.mxu0 %v251
    %v308 = vpop.f32.mrf.mxu0
    %v309 = vadd.f32 0.0, %v308
    %310 = vdwg.mxu0
    %v311 = vmul.f32 %v237, 1.5
    %v312 = vmul.f32 %v238, 1.5
    %v313 = vmul.f32 %v239, 1.5
    %v314 = vmul.f32 %v240, 1.5
    %v316 = vsel %vm121, %v271, 0
    %v319 = vsel %vm121, %v274, 0
    %v322 = vsel %vm121, %v277, 0
    %v325 = vsel %vm121, %v280, 0
    %327 = vmatpush.msra.mxu0 0.0
    %328 = vmatpush.msra.mxu0 0.0
    %329 = vmatpush.msra.mxu0 0.0
    %330 = vmatpush.msra.mxu0 0.0
    %331 = vmatpush.msra.mxu0 0.0
    %332 = vmatpush.msra.mxu0 0.0
    %333 = vmatpush.msra.mxu0 0.0
    %334 = vmatpush.msra.mxu0 0.0
    %335 = vmatpush.msra.mxu0 0.0
    %336 = vmatpush.msra.mxu0 0.0
    %337 = vmatpush.msra.mxu0 0.0
    %338 = vmatpush.msra.mxu0 0.0
    %339 = vmatpush.msra.mxu0 %v309
    %340 = vmatpush.msra.mxu0 %v306
    %341 = vmatpush.msra.mxu0 %v303
    %342 = vmatpush.msra.mxu0 %v300
    %343 = vmatmul.f32.gmra.mxu0 %v316
    %v344 = vpop.f32.mrf.mxu0
    %v345 = vadd.f32 0.0, %v344
    %346 = vmatmul.f32.gmra.mxu0 %v319
    %v347 = vpop.f32.mrf.mxu0
    %v348 = vadd.f32 0.0, %v347
    %349 = vmatmul.f32.gmra.mxu0 %v322
    %v350 = vpop.f32.mrf.mxu0
    %v351 = vadd.f32 0.0, %v350
    %352 = vmatmul.f32.gmra.mxu0 %v325
    %v353 = vpop.f32.mrf.mxu0
    %v354 = vadd.f32 0.0, %v353
    %355 = vdwg.mxu0
    %v356 = vmul.f32 %v345, 0.5
    %v357 = vmul.f32 %v348, 0.5
    %v358 = vmul.f32 %v351, 0.5
    %v359 = vmul.f32 %v354, 0.5
    %v360 = vsub.f32 %v311, %v356
    %v361 = vsub.f32 %v312, %v357
    %v362 = vsub.f32 %v313, %v358
    %v363 = vsub.f32 %v314, %v359
    %v365 = vsel %vm121, %v360, 0
    %v368 = vsel %vm121, %v361, 0
    %v371 = vsel %vm121, %v362, 0
    %v374 = vsel %vm121, %v363, 0
    %376 = vmatpush.msra.mxu0 0.0
    %377 = vmatpush.msra.mxu0 0.0
    %378 = vmatpush.msra.mxu0 0.0
    %379 = vmatpush.msra.mxu0 0.0
    %380 = vmatpush.msra.mxu0 0.0
    %381 = vmatpush.msra.mxu0 0.0
    %382 = vmatpush.msra.mxu0 0.0
    %383 = vmatpush.msra.mxu0 0.0
    %384 = vmatpush.msra.mxu0 0.0
    %385 = vmatpush.msra.mxu0 0.0
    %386 = vmatpush.msra.mxu0 0.0
    %387 = vmatpush.msra.mxu0 0.0
    %388 = vmatpush.msra.mxu0 %v363
    %389 = vmatpush.msra.mxu0 %v362
    %390 = vmatpush.msra.mxu0 %v361
    %391 = vmatpush.msra.mxu0 %v360
    %392 = vmatmul.f32.gmra.mxu0 %v365
    %v393 = vpop.f32.mrf.mxu0
    %v394 = vadd.f32 0.0, %v393
    %395 = vmatmul.f32.gmra.mxu0 %v368
    %v396 = vpop.f32.mrf.mxu0
    %v397 = vadd.f32 0.0, %v396
    %398 = vmatmul.f32.gmra.mxu0 %v371
    %v399 = vpop.f32.mrf.mxu0
    %v400 = vadd.f32 0.0, %v399
    %401 = vmatmul.f32.gmra.mxu0 %v374
    %v402 = vpop.f32.mrf.mxu0
    %v403 = vadd.f32 0.0, %v402
    %404 = vdwg.mxu0
    %405 = vmatpush.msra.mxu0 0.0
    %406 = vmatpush.msra.mxu0 0.0
    %407 = vmatpush.msra.mxu0 0.0
    %408 = vmatpush.msra.mxu0 0.0
    %409 = vmatpush.msra.mxu0 0.0
    %410 = vmatpush.msra.mxu0 0.0
    %411 = vmatpush.msra.mxu0 0.0
    %412 = vmatpush.msra.mxu0 0.0
    %413 = vmatpush.msra.mxu0 0.0
    %414 = vmatpush.msra.mxu0 0.0
    %415 = vmatpush.msra.mxu0 0.0
    %416 = vmatpush.msra.mxu0 0.0
    %417 = vmatpush.msra.mxu0 %v208
    %418 = vmatpush.msra.mxu0 %v205
    %419 = vmatpush.msra.mxu0 %v202
    %420 = vmatpush.msra.mxu0 %v199
    %421 = vmatmul.f32.gmra.mxu0 %v365
    %v422 = vpop.f32.mrf.mxu0
    %v423 = vadd.f32 0.0, %v422
    %424 = vmatmul.f32.gmra.mxu0 %v368
    %v425 = vpop.f32.mrf.mxu0
    %v426 = vadd.f32 0.0, %v425
    %427 = vmatmul.f32.gmra.mxu0 %v371
    %v428 = vpop.f32.mrf.mxu0
    %v429 = vadd.f32 0.0, %v428
    %430 = vmatmul.f32.gmra.mxu0 %v374
    %v431 = vpop.f32.mrf.mxu0
    %v432 = vadd.f32 0.0, %v431
    %433 = vdwg.mxu0
    %v434 = vmul.f32 %v360, 1.5
    %v435 = vmul.f32 %v361, 1.5
    %v436 = vmul.f32 %v362, 1.5
    %v437 = vmul.f32 %v363, 1.5
    %v439 = vsel %vm121, %v394, 0
    %v442 = vsel %vm121, %v397, 0
    %v445 = vsel %vm121, %v400, 0
    %v448 = vsel %vm121, %v403, 0
    %450 = vmatpush.msra.mxu0 0.0
    %451 = vmatpush.msra.mxu0 0.0
    %452 = vmatpush.msra.mxu0 0.0
    %453 = vmatpush.msra.mxu0 0.0
    %454 = vmatpush.msra.mxu0 0.0
    %455 = vmatpush.msra.mxu0 0.0
    %456 = vmatpush.msra.mxu0 0.0
    %457 = vmatpush.msra.mxu0 0.0
    %458 = vmatpush.msra.mxu0 0.0
    %459 = vmatpush.msra.mxu0 0.0
    %460 = vmatpush.msra.mxu0 0.0
    %461 = vmatpush.msra.mxu0 0.0
    %462 = vmatpush.msra.mxu0 %v432
    %463 = vmatpush.msra.mxu0 %v429
    %464 = vmatpush.msra.mxu0 %v426
    %465 = vmatpush.msra.mxu0 %v423
    %466 = vmatmul.f32.gmra.mxu0 %v439
    %v467 = vpop.f32.mrf.mxu0
    %v468 = vadd.f32 0.0, %v467
    %469 = vmatmul.f32.gmra.mxu0 %v442
    %v470 = vpop.f32.mrf.mxu0
    %v471 = vadd.f32 0.0, %v470
    %472 = vmatmul.f32.gmra.mxu0 %v445
    %v473 = vpop.f32.mrf.mxu0
    %v474 = vadd.f32 0.0, %v473
    %475 = vmatmul.f32.gmra.mxu0 %v448
    %v476 = vpop.f32.mrf.mxu0
    %v477 = vadd.f32 0.0, %v476
    %478 = vdwg.mxu0
    %v479 = vmul.f32 %v468, 0.5
    %v480 = vmul.f32 %v471, 0.5
    %v481 = vmul.f32 %v474, 0.5
    %v482 = vmul.f32 %v477, 0.5
    %v483 = vsub.f32 %v434, %v479
    %v484 = vsub.f32 %v435, %v480
    %v485 = vsub.f32 %v436, %v481
    %v486 = vsub.f32 %v437, %v482
    %v488 = vsel %vm121, %v483, 0
    %v491 = vsel %vm121, %v484, 0
    %v494 = vsel %vm121, %v485, 0
    %v497 = vsel %vm121, %v486, 0
    %499 = vmatpush.msra.mxu0 0.0
    %500 = vmatpush.msra.mxu0 0.0
    %501 = vmatpush.msra.mxu0 0.0
    %502 = vmatpush.msra.mxu0 0.0
    %503 = vmatpush.msra.mxu0 0.0
    %504 = vmatpush.msra.mxu0 0.0
    %505 = vmatpush.msra.mxu0 0.0
    %506 = vmatpush.msra.mxu0 0.0
    %507 = vmatpush.msra.mxu0 0.0
    %508 = vmatpush.msra.mxu0 0.0
    %509 = vmatpush.msra.mxu0 0.0
    %510 = vmatpush.msra.mxu0 0.0
    %511 = vmatpush.msra.mxu0 %v486
    %512 = vmatpush.msra.mxu0 %v485
    %513 = vmatpush.msra.mxu0 %v484
    %514 = vmatpush.msra.mxu0 %v483
    %515 = vmatmul.f32.gmra.mxu0 %v488
    %v516 = vpop.f32.mrf.mxu0
    %v517 = vadd.f32 0.0, %v516
    %518 = vmatmul.f32.gmra.mxu0 %v491
    %v519 = vpop.f32.mrf.mxu0
    %v520 = vadd.f32 0.0, %v519
    %521 = vmatmul.f32.gmra.mxu0 %v494
    %v522 = vpop.f32.mrf.mxu0
    %v523 = vadd.f32 0.0, %v522
    %524 = vmatmul.f32.gmra.mxu0 %v497
    %v525 = vpop.f32.mrf.mxu0
    %v526 = vadd.f32 0.0, %v525
    %527 = vdwg.mxu0
    %528 = vmatpush.msra.mxu0 0.0
    %529 = vmatpush.msra.mxu0 0.0
    %530 = vmatpush.msra.mxu0 0.0
    %531 = vmatpush.msra.mxu0 0.0
    %532 = vmatpush.msra.mxu0 0.0
    %533 = vmatpush.msra.mxu0 0.0
    %534 = vmatpush.msra.mxu0 0.0
    %535 = vmatpush.msra.mxu0 0.0
    %536 = vmatpush.msra.mxu0 0.0
    %537 = vmatpush.msra.mxu0 0.0
    %538 = vmatpush.msra.mxu0 0.0
    %539 = vmatpush.msra.mxu0 0.0
    %540 = vmatpush.msra.mxu0 %v208
    %541 = vmatpush.msra.mxu0 %v205
    %542 = vmatpush.msra.mxu0 %v202
    %543 = vmatpush.msra.mxu0 %v199
    %544 = vmatmul.f32.gmra.mxu0 %v488
    %v545 = vpop.f32.mrf.mxu0
    %v546 = vadd.f32 0.0, %v545
    %547 = vmatmul.f32.gmra.mxu0 %v491
    %v548 = vpop.f32.mrf.mxu0
    %v549 = vadd.f32 0.0, %v548
    %550 = vmatmul.f32.gmra.mxu0 %v494
    %v551 = vpop.f32.mrf.mxu0
    %v552 = vadd.f32 0.0, %v551
    %553 = vmatmul.f32.gmra.mxu0 %v497
    %v554 = vpop.f32.mrf.mxu0
    %v555 = vadd.f32 0.0, %v554
    %556 = vdwg.mxu0
    %v557 = vmul.f32 %v483, 1.5
    %v558 = vmul.f32 %v484, 1.5
    %v559 = vmul.f32 %v485, 1.5
    %v560 = vmul.f32 %v486, 1.5
    %v562 = vsel %vm121, %v517, 0
    %v565 = vsel %vm121, %v520, 0
    %v568 = vsel %vm121, %v523, 0
    %v571 = vsel %vm121, %v526, 0
    %573 = vmatpush.msra.mxu0 0.0
    %574 = vmatpush.msra.mxu0 0.0
    %575 = vmatpush.msra.mxu0 0.0
    %576 = vmatpush.msra.mxu0 0.0
    %577 = vmatpush.msra.mxu0 0.0
    %578 = vmatpush.msra.mxu0 0.0
    %579 = vmatpush.msra.mxu0 0.0
    %580 = vmatpush.msra.mxu0 0.0
    %581 = vmatpush.msra.mxu0 0.0
    %582 = vmatpush.msra.mxu0 0.0
    %583 = vmatpush.msra.mxu0 0.0
    %584 = vmatpush.msra.mxu0 0.0
    %585 = vmatpush.msra.mxu0 %v555
    %586 = vmatpush.msra.mxu0 %v552
    %587 = vmatpush.msra.mxu0 %v549
    %588 = vmatpush.msra.mxu0 %v546
    %589 = vmatmul.f32.gmra.mxu0 %v562
    %v590 = vpop.f32.mrf.mxu0
    %v591 = vadd.f32 0.0, %v590
    %592 = vmatmul.f32.gmra.mxu0 %v565
    %v593 = vpop.f32.mrf.mxu0
    %v594 = vadd.f32 0.0, %v593
    %595 = vmatmul.f32.gmra.mxu0 %v568
    %v596 = vpop.f32.mrf.mxu0
    %v597 = vadd.f32 0.0, %v596
    %598 = vmatmul.f32.gmra.mxu0 %v571
    %v599 = vpop.f32.mrf.mxu0
    %v600 = vadd.f32 0.0, %v599
    %601 = vdwg.mxu0
    %v602 = vmul.f32 %v591, 0.5
    %v603 = vmul.f32 %v594, 0.5
    %v604 = vmul.f32 %v597, 0.5
    %v605 = vmul.f32 %v600, 0.5
    %v606 = vsub.f32 %v557, %v602
    %v607 = vsub.f32 %v558, %v603
    %v608 = vsub.f32 %v559, %v604
    %v609 = vsub.f32 %v560, %v605
    %v611 = vsel %vm121, %v606, 0
    %v614 = vsel %vm121, %v607, 0
    %v617 = vsel %vm121, %v608, 0
    %v620 = vsel %vm121, %v609, 0
    %622 = vmatpush.msra.mxu0 0.0
    %623 = vmatpush.msra.mxu0 0.0
    %624 = vmatpush.msra.mxu0 0.0
    %625 = vmatpush.msra.mxu0 0.0
    %626 = vmatpush.msra.mxu0 0.0
    %627 = vmatpush.msra.mxu0 0.0
    %628 = vmatpush.msra.mxu0 0.0
    %629 = vmatpush.msra.mxu0 0.0
    %630 = vmatpush.msra.mxu0 0.0
    %631 = vmatpush.msra.mxu0 0.0
    %632 = vmatpush.msra.mxu0 0.0
    %633 = vmatpush.msra.mxu0 0.0
    %634 = vmatpush.msra.mxu0 %v609
    %635 = vmatpush.msra.mxu0 %v608
    %636 = vmatpush.msra.mxu0 %v607
    %637 = vmatpush.msra.mxu0 %v606
    %638 = vmatmul.f32.gmra.mxu0 %v611
    %v639 = vpop.f32.mrf.mxu0
    %v640 = vadd.f32 0.0, %v639
    %641 = vmatmul.f32.gmra.mxu0 %v614
    %v642 = vpop.f32.mrf.mxu0
    %v643 = vadd.f32 0.0, %v642
    %644 = vmatmul.f32.gmra.mxu0 %v617
    %v645 = vpop.f32.mrf.mxu0
    %v646 = vadd.f32 0.0, %v645
    %647 = vmatmul.f32.gmra.mxu0 %v620
    %v648 = vpop.f32.mrf.mxu0
    %v649 = vadd.f32 0.0, %v648
    %650 = vdwg.mxu0
    %651 = vmatpush.msra.mxu0 0.0
    %652 = vmatpush.msra.mxu0 0.0
    %653 = vmatpush.msra.mxu0 0.0
    %654 = vmatpush.msra.mxu0 0.0
    %655 = vmatpush.msra.mxu0 0.0
    %656 = vmatpush.msra.mxu0 0.0
    %657 = vmatpush.msra.mxu0 0.0
    %658 = vmatpush.msra.mxu0 0.0
    %659 = vmatpush.msra.mxu0 0.0
    %660 = vmatpush.msra.mxu0 0.0
    %661 = vmatpush.msra.mxu0 0.0
    %662 = vmatpush.msra.mxu0 0.0
    %663 = vmatpush.msra.mxu0 %v208
    %664 = vmatpush.msra.mxu0 %v205
    %665 = vmatpush.msra.mxu0 %v202
    %666 = vmatpush.msra.mxu0 %v199
    %667 = vmatmul.f32.gmra.mxu0 %v611
    %v668 = vpop.f32.mrf.mxu0
    %v669 = vadd.f32 0.0, %v668
    %670 = vmatmul.f32.gmra.mxu0 %v614
    %v671 = vpop.f32.mrf.mxu0
    %v672 = vadd.f32 0.0, %v671
    %673 = vmatmul.f32.gmra.mxu0 %v617
    %v674 = vpop.f32.mrf.mxu0
    %v675 = vadd.f32 0.0, %v674
    %676 = vmatmul.f32.gmra.mxu0 %v620
    %v677 = vpop.f32.mrf.mxu0
    %v678 = vadd.f32 0.0, %v677
    %679 = vdwg.mxu0
    %v680 = vmul.f32 %v606, 1.5
    %v681 = vmul.f32 %v607, 1.5
    %v682 = vmul.f32 %v608, 1.5
    %v683 = vmul.f32 %v609, 1.5
    %v685 = vsel %vm121, %v640, 0
    %v688 = vsel %vm121, %v643, 0
    %v691 = vsel %vm121, %v646, 0
    %v694 = vsel %vm121, %v649, 0
    %696 = vmatpush.msra.mxu0 0.0
    %697 = vmatpush.msra.mxu0 0.0
    %698 = vmatpush.msra.mxu0 0.0
    %699 = vmatpush.msra.mxu0 0.0
    %700 = vmatpush.msra.mxu0 0.0
    %701 = vmatpush.msra.mxu0 0.0
    %702 = vmatpush.msra.mxu0 0.0
    %703 = vmatpush.msra.mxu0 0.0
    %704 = vmatpush.msra.mxu0 0.0
    %705 = vmatpush.msra.mxu0 0.0
    %706 = vmatpush.msra.mxu0 0.0
    %707 = vmatpush.msra.mxu0 0.0
    %708 = vmatpush.msra.mxu0 %v678
    %709 = vmatpush.msra.mxu0 %v675
    %710 = vmatpush.msra.mxu0 %v672
    %711 = vmatpush.msra.mxu0 %v669
    %712 = vmatmul.f32.gmra.mxu0 %v685
    %v713 = vpop.f32.mrf.mxu0
    %v714 = vadd.f32 0.0, %v713
    %715 = vmatmul.f32.gmra.mxu0 %v688
    %v716 = vpop.f32.mrf.mxu0
    %v717 = vadd.f32 0.0, %v716
    %718 = vmatmul.f32.gmra.mxu0 %v691
    %v719 = vpop.f32.mrf.mxu0
    %v720 = vadd.f32 0.0, %v719
    %721 = vmatmul.f32.gmra.mxu0 %v694
    %v722 = vpop.f32.mrf.mxu0
    %v723 = vadd.f32 0.0, %v722
    %724 = vdwg.mxu0
    %v725 = vmul.f32 %v714, 0.5
    %v726 = vmul.f32 %v717, 0.5
    %v727 = vmul.f32 %v720, 0.5
    %v728 = vmul.f32 %v723, 0.5
    %v729 = vsub.f32 %v680, %v725
    %v730 = vsub.f32 %v681, %v726
    %v731 = vsub.f32 %v682, %v727
    %v732 = vsub.f32 %v683, %v728
    %v733 = vld [vmem:[#allocation5] sm:$0xff]
    %v734 = vld [vmem:[#allocation5 + $0x8] sm:$0xff]
    %v735 = vld [vmem:[#allocation5 + $0x10] sm:$0xff]
    %v736 = vld [vmem:[#allocation5 + $0x18] sm:$0xff]
    %v738 = vsel %vm121, %v729, 0
    %v741 = vsel %vm121, %v730, 0
    %v744 = vsel %vm121, %v731, 0
    %v747 = vsel %vm121, %v732, 0
    %749 = vmatpush.msra.mxu0 0.0
    %750 = vmatpush.msra.mxu0 0.0
    %751 = vmatpush.msra.mxu0 0.0
    %752 = vmatpush.msra.mxu0 0.0
    %753 = vmatpush.msra.mxu0 0.0
    %754 = vmatpush.msra.mxu0 0.0
    %755 = vmatpush.msra.mxu0 0.0
    %756 = vmatpush.msra.mxu0 0.0
    %757 = vmatpush.msra.mxu0 0.0
    %758 = vmatpush.msra.mxu0 0.0
    %759 = vmatpush.msra.mxu0 0.0
    %760 = vmatpush.msra.mxu0 0.0
    %761 = vmatpush.msra.mxu0 %v736
    %762 = vmatpush.msra.mxu0 %v735
    %763 = vmatpush.msra.mxu0 %v734
    %764 = vmatpush.msra.mxu0 %v733
    %765 = vmatmul.f32.gmra.mxu0 %v738
    %v766 = vpop.f32.mrf.mxu0
    %v767 = vadd.f32 0.0, %v766
    %768 = vmatmul.f32.gmra.mxu0 %v741
    %v769 = vpop.f32.mrf.mxu0
    %v770 = vadd.f32 0.0, %v769
    %771 = vmatmul.f32.gmra.mxu0 %v744
    %v772 = vpop.f32.mrf.mxu0
    %v773 = vadd.f32 0.0, %v772
    %774 = vmatmul.f32.gmra.mxu0 %v747
    %v775 = vpop.f32.mrf.mxu0
    %v776 = vadd.f32 0.0, %v775
    %777 = vdwg.mxu0
    %778 = vxpose.xlu0.b32.start [1/16] %v165, 128
    %779 = vxpose.xlu0.b32.cont [2/16] %v166, 128
    %780 = vxpose.xlu0.b32.cont [3/16] %v167, 128
    %781 = vxpose.xlu0.b32.cont [4/16] %v168, 128
    %782 = vxpose.xlu0.b32.cont [5/16] 0.0, 128
    %783 = vxpose.xlu0.b32.cont [6/16] 0.0, 128
    %784 = vxpose.xlu0.b32.cont [7/16] 0.0, 128
    %785 = vxpose.xlu0.b32.cont [8/16] 0.0, 128
    %786 = vxpose.xlu0.b32.cont [9/16] 0.0, 128
    %787 = vxpose.xlu0.b32.cont [10/16] 0.0, 128
    %788 = vxpose.xlu0.b32.cont [11/16] 0.0, 128
    %789 = vxpose.xlu0.b32.cont [12/16] 0.0, 128
    %790 = vxpose.xlu0.b32.cont [13/16] 0.0, 128
    %791 = vxpose.xlu0.b32.cont [14/16] 0.0, 128
    %792 = vxpose.xlu0.b32.cont [15/16] 0.0, 128
    %793 = vxpose.xlu0.b32.end [16/16] 0.0, 128
    %v794 = vpop.trf.xlu0
    %v795 = vpop.trf.xlu0
    %v796 = vpop.trf.xlu0
    %v797 = vpop.trf.xlu0
    %v798 = vpop.trf.xlu0
    %v799 = vpop.trf.xlu0
    %v800 = vpop.trf.xlu0
    %v801 = vpop.trf.xlu0
    %v802 = vpop.trf.xlu0
    %v803 = vpop.trf.xlu0
    %v804 = vpop.trf.xlu0
    %v805 = vpop.trf.xlu0
    %v806 = vpop.trf.xlu0
    %v807 = vpop.trf.xlu0
    %v808 = vpop.trf.xlu0
    %v809 = vpop.trf.xlu0
    %v811 = vsel %vm121, %v794, 0
    %v814 = vsel %vm121, %v795, 0
    %v817 = vsel %vm121, %v796, 0
    %v820 = vsel %vm121, %v797, 0
    %v823 = vsel %vm121, %v798, 0
    %v826 = vsel %vm121, %v799, 0
    %v829 = vsel %vm121, %v800, 0
    %v832 = vsel %vm121, %v801, 0
    %834 = vmatpush.msra.mxu0 0.0
    %835 = vmatpush.msra.mxu0 0.0
    %836 = vmatpush.msra.mxu0 0.0
    %837 = vmatpush.msra.mxu0 0.0
    %838 = vmatpush.msra.mxu0 0.0
    %839 = vmatpush.msra.mxu0 0.0
    %840 = vmatpush.msra.mxu0 0.0
    %841 = vmatpush.msra.mxu0 0.0
    %842 = vmatpush.msra.mxu0 0.0
    %843 = vmatpush.msra.mxu0 0.0
    %844 = vmatpush.msra.mxu0 0.0
    %845 = vmatpush.msra.mxu0 0.0
    %846 = vmatpush.msra.mxu0 %v776
    %847 = vmatpush.msra.mxu0 %v773
    %848 = vmatpush.msra.mxu0 %v770
    %849 = vmatpush.msra.mxu0 %v767
    %850 = vmatmul.f32.gmra.mxu0 %v811
    %v851 = vpop.f32.mrf.mxu0
    %v852 = vadd.f32 0.0, %v851
    %853 = vmatmul.f32.gmra.mxu0 %v814
    %v854 = vpop.f32.mrf.mxu0
    %v855 = vadd.f32 0.0, %v854
    %856 = vmatmul.f32.gmra.mxu0 %v817
    %v857 = vpop.f32.mrf.mxu0
    %v858 = vadd.f32 0.0, %v857
    %859 = vmatmul.f32.gmra.mxu0 %v820
    %v860 = vpop.f32.mrf.mxu0
    %v861 = vadd.f32 0.0, %v860
    %862 = vmatmul.f32.gmra.mxu0 %v823
    %v863 = vpop.f32.mrf.mxu0
    %v864 = vadd.f32 0.0, %v863
    %865 = vmatmul.f32.gmra.mxu0 %v826
    %v866 = vpop.f32.mrf.mxu0
    %v867 = vadd.f32 0.0, %v866
    %868 = vmatmul.f32.gmra.mxu0 %v829
    %v869 = vpop.f32.mrf.mxu0
    %v870 = vadd.f32 0.0, %v869
    %871 = vmatmul.f32.gmra.mxu0 %v832
    %v872 = vpop.f32.mrf.mxu0
    %v873 = vadd.f32 0.0, %v872
    %874 = vdwg.mxu0
    %v875 = vpack.c.bf16 %v852, %v852
    %v876 = vpack.c.bf16 %v855, %v855
    %v877 = vpack.c.bf16 %v858, %v858
    %v878 = vpack.c.bf16 %v861, %v861
    %v879 = vpack.c.bf16 %v864, %v864
    %v880 = vpack.c.bf16 %v867, %v867
    %v881 = vpack.c.bf16 %v870, %v870
    %v882 = vpack.c.bf16 %v873, %v873
    %883 = vst [vmem:[#allocation7] sm:$0xf] %v875
    %884 = vst [vmem:[#allocation7 + $0x4] sm:$0xf] %v876
    %885 = vst [vmem:[#allocation7 + $0x8] sm:$0xf] %v877
    %886 = vst [vmem:[#allocation7 + $0xc] sm:$0xf] %v878
    %887 = vst [vmem:[#allocation7 + $0x10] sm:$0xf] %v879
    %888 = vst [vmem:[#allocation7 + $0x14] sm:$0xf] %v880
    %889 = vst [vmem:[#allocation7 + $0x18] sm:$0xf] %v881
    %890 = vst [vmem:[#allocation7 + $0x1c] sm:$0xf] %v882
    // Predicated region
    $region18: #{tpu_custom_call.1} parent=1 // pred_check
      _
    $region19: #{tpu_custom_call.1} parent=1 // pred_check_branch
      %892 = sbr.rel (0) target = $region21
    $region20: #{tpu_custom_call.1} parent=1 // pred_region
      %894 = vsyncadd [#allocation4], 0
      %s895 = sshll.u32 [#allocation7], 4
      %s896 = int_to_ptr.vmem [resolvable:$true] %s895
      %s897 = sshll.u32 %s2, 4
      %s898 = int_to_ptr.hbm [resolvable:$true] %s897
      %903 = dma.vmem_to_hbm [thread:$0]  %s896, 512, %s898, [#allocation4], 64, 64, 4
    $region21: #{tpu_custom_call.1} parent=1 // pred_fallthru
      _
    // Predicated region
    $region22: #{tpu_custom_call.1} parent=1 // pred_check
      _
    $region23: #{tpu_custom_call.1} parent=1 // pred_check_branch
      %905 = sbr.rel (0) target = $region25
    $region24: #{tpu_custom_call.1} parent=1 // pred_region
      %907 = dma.done [#allocation4], 512
    $region25: #{tpu_custom_call.1} parent=1 // pred_fallthru
      _
    %908 = vsyncpa [#allocation3], 1
    %909 = vsyncpa [#allocation6], 1
    %910 = vsyncpa [#allocation4], 1

</llo_original>
